<compile_context>
chip_gen: v7x
topology: tpu7x:2x2x1
jax: 0.10.0
libtpu: 0.0.40
codegen_flags: <defaults>
</compile_context>

<pallas_src>
import functools

import numpy as np
import jax
import jax.numpy as jnp
from jax.experimental import pallas as pl
from jax.experimental.pallas import tpu as pltpu


# ----------------------------------------------------------------------------
# db1 (Haar) decomposition filters (what pywt.Wavelet('db1') gives)
# ----------------------------------------------------------------------------
_DB1_DEC_LO = np.array([0.7071067811865476, 0.7071067811865476], dtype=np.float64)
_DB1_DEC_HI = np.array([-0.7071067811865476, 0.7071067811865476], dtype=np.float64)


def _prep_filt_afb1d(h0, h1):
    """Time-reverse the filters (prep_filt_afb1d), since F.conv2d correlates."""
    h0 = np.array(h0, dtype=np.float32).ravel()[::-1].copy()
    h1 = np.array(h1, dtype=np.float32).ravel()[::-1].copy()
    return h0, h1


# ----------------------------------------------------------------------------
# Pallas kernel: polyphase block -> (yl, yh) blocks via the Haar butterfly
# ----------------------------------------------------------------------------
def _dwt_haar_kernel(x_ref, yl_ref, yh_ref, *, scale):
    # x_ref block: (Bnc, 4, tH, Wh) polyphase components of (n, c) slices:
    #   0: x[2i, 2j]   1: x[2i, 2j+1]   2: x[2i+1, 2j]   3: x[2i+1, 2j+1]
    a = x_ref[:, 0].astype(jnp.float32)
    b = x_ref[:, 1].astype(jnp.float32)
    c = x_ref[:, 2].astype(jnp.float32)
    d = x_ref[:, 3].astype(jnp.float32)

    # Haar butterfly (unscaled analysis filter bank).
    s = a + b          # row-lowpass  at even rows
    u = a - b          # row-highpass at even rows
    t = c + d          # row-lowpass  at odd  rows
    v = c - d          # row-highpass at odd  rows

    odt = yl_ref.dtype
    yl_ref[...] = (scale * (s + t)).astype(odt)     # LL (yl)
    yh_ref[:, 0] = (scale * (s - t)).astype(odt)    # LH (col-hi of row-lo)
    yh_ref[:, 1] = (scale * (u + v)).astype(odt)    # HL (col-lo of row-hi)
    yh_ref[:, 2] = (scale * (u - v)).astype(odt)    # HH


def _choose_tiles(NC, Hh, Wh, itemsize):
    """Pick (Bnc, tH) so the per-step block set (in + yl + yh = 8*Bnc*tH*Wh
    elements) stays around ~6 MiB (double-buffered ~12 MiB: fits the scoped-VMEM
    budget on v5e/v6e/v7x), while keeping (8,128)-compatible block dims."""
    max_elems = max(1, (768 * 1024) // itemsize)    # Bnc*tH*Wh element budget
    plane = Hh * Wh
    if plane <= max_elems:
        tH = Hh                                     # full H tile (always legal)
        Bnc = max(1, min(NC, max_elems // plane))
        while NC % Bnc:                             # keep the grid exact
            Bnc -= 1
    else:
        Bnc = 1
        tH = max(8, ((max_elems // Wh) // 8) * 8)   # multiple of 8 sublanes
        tH = min(tH, Hh)                            # tH==Hh also legal if Hh<8
    return Bnc, tH


# ----------------------------------------------------------------------------
# Wrapper reproducing DWTForward.forward semantics
# ----------------------------------------------------------------------------
class DWTForwardPallas:
    def __init__(self, J=1, mode="zero"):
        assert mode == "zero", "only mode='zero' implemented"
        # TODO(synk): only db1 (L=2) filters and even H/W are supported; longer
        # wavelets / other padding modes need the generic padded-conv afb1d path.
        h0, h1 = _prep_filt_afb1d(_DB1_DEC_LO, _DB1_DEC_HI)
        c = float(h0[0])
        assert np.allclose(h0, [c, c]) and np.allclose(h1, [c, -c]), \
            "butterfly form only valid for db1/Haar"
        self.J = J
        self._scale = c * c   # separable row*col filter gain (= 0.5 for db1)

    def _one_level(self, x):
        N, C, H, W = x.shape
        assert H % 2 == 0 and W % 2 == 0, "db1 zero-mode path needs even H and W"
        Hh, Wh = H // 2, W // 2
        NC = N * C

        # Polyphase deinterleave as one reshape+transpose (XLA may fuse it into
        # the pallas_call input via allow_input_fusion).
        xr = x.reshape(NC, Hh, 2, Wh, 2)
        poly = jnp.transpose(xr, (0, 2, 4, 1, 3)).reshape(NC, 4, Hh, Wh)

        Bnc, tH = _choose_tiles(NC, Hh, Wh, jnp.dtype(x.dtype).itemsize)
        grid = (NC // Bnc, pl.cdiv(Hh, tH))

        kernel = functools.partial(_dwt_haar_kernel, scale=self._scale)
        yl, yh = pl.pallas_call(
            kernel,
            out_shape=(
                jax.ShapeDtypeStruct((NC, Hh, Wh), x.dtype),
                jax.ShapeDtypeStruct((NC, 3, Hh, Wh), x.dtype),
            ),
            grid=grid,
            in_specs=[
                pl.BlockSpec((Bnc, 4, tH, Wh), lambda i, r: (i, 0, r, 0)),
            ],
            out_specs=(
                pl.BlockSpec((Bnc, tH, Wh), lambda i, r: (i, r, 0)),
                pl.BlockSpec((Bnc, 3, tH, Wh), lambda i, r: (i, 0, r, 0)),
            ),
            compiler_params=pltpu.CompilerParams(
                dimension_semantics=("parallel", "parallel"),
                vmem_limit_bytes=32 * 1024 * 1024,
                allow_input_fusion=[True],
            ),
        )(poly)

        return yl.reshape(N, C, Hh, Wh), yh.reshape(N, C, 3, Hh, Wh)

    def __call__(self, x):
        # Multi-level: spatial dims must stay even at every level (db1/zero path).
        yh = []
        ll = x
        for _ in range(self.J):
            ll, high = self._one_level(ll)
            yh.append(high)
        return ll, yh


# ----------------------------------------------------------------------------
# Pure numpy reference (mirrors afb1d conv2d correlation semantics + AFB2D order)
# ----------------------------------------------------------------------------
def _ref_dwt_level(x, dec_lo, dec_hi):
    h0 = dec_lo[::-1]
    h1 = dec_hi[::-1]
    lo = h0[0] * x[..., 0::2] + h0[1] * x[..., 1::2]
    hi = h1[0] * x[..., 0::2] + h1[1] * x[..., 1::2]
    LL = h0[0] * lo[..., 0::2, :] + h0[1] * lo[..., 1::2, :]
    LH = h1[0] * lo[..., 0::2, :] + h1[1] * lo[..., 1::2, :]
    HL = h0[0] * hi[..., 0::2, :] + h0[1] * hi[..., 1::2, :]
    HH = h1[0] * hi[..., 0::2, :] + h1[1] * hi[..., 1::2, :]
    return LL, np.stack([LH, HL, HH], axis=2)


if __name__ == "__main__":
    key = jax.random.PRNGKey(0)
    N, C, H, W = 2, 4, 16, 16
    x = jax.random.normal(key, (N, C, H, W), dtype=jnp.float32)

    dwt = DWTForwardPallas(J=1, mode="zero")
    yl, yh = dwt(x)
    yl = jax.block_until_ready(yl)
    yh = [jax.block_until_ready(h) for h in yh]

    # Correctness check against the float64 reference.
    x_np = np.asarray(x, dtype=np.float64)
    ref_ll, ref_h = _ref_dwt_level(x_np, _DB1_DEC_LO, _DB1_DEC_HI)
    assert yl.shape == (N, C, H // 2, W // 2)
    assert yh[0].shape == (N, C, 3, H // 2, W // 2)
    assert np.allclose(np.asarray(yl), ref_ll, atol=1e-5)
    assert np.allclose(np.asarray(yh[0]), ref_h, atol=1e-5)

    print("KERNEL_OK")
</pallas_src>

<mosaic_0001>
module attributes {stable_mosaic.version = 11 : i64} {
  func.func @_dwt_haar_kernel(%arg0: i32, %arg1: i32, %arg2: memref<8x4x8x8xf32, #tpu.memory_space<vmem>>, %arg3: memref<8x8x8xf32, #tpu.memory_space<vmem>>, %arg4: memref<8x3x8x8xf32, #tpu.memory_space<vmem>>) attributes {dimension_semantics = [#tpu.dimension_semantics<parallel>, #tpu.dimension_semantics<parallel>], iteration_bounds = array<i64: 1, 1>, scalar_prefetch = 0 : i64, scratch_operands = 0 : i64, tpu.core_type = #tpu.core_type<tc>, window_params = [{transform_indices = @transform_0, window_bounds = array<i64: 8, 4, 8, 8>}, {transform_indices = @transform_1, window_bounds = array<i64: 8, 8, 8>}, {transform_indices = @transform_2, window_bounds = array<i64: 8, 3, 8, 8>}]} {
    %c0 = arith.constant 0 : index
    %c0_0 = arith.constant 0 : index
    %c0_1 = arith.constant 0 : index
    %c0_2 = arith.constant 0 : index
    %0 = vector.load %arg2[%c0, %c0_0, %c0_1, %c0_2] : memref<8x4x8x8xf32, #tpu.memory_space<vmem>>, vector<8x1x8x8xf32>
    %1 = vector.shape_cast %0 : vector<8x1x8x8xf32> to vector<8x8x8xf32>
    %c0_3 = arith.constant 0 : index
    %c1 = arith.constant 1 : index
    %c0_4 = arith.constant 0 : index
    %c0_5 = arith.constant 0 : index
    %2 = vector.load %arg2[%c0_3, %c1, %c0_4, %c0_5] : memref<8x4x8x8xf32, #tpu.memory_space<vmem>>, vector<8x1x8x8xf32>
    %3 = vector.shape_cast %2 : vector<8x1x8x8xf32> to vector<8x8x8xf32>
    %c0_6 = arith.constant 0 : index
    %c2 = arith.constant 2 : index
    %c0_7 = arith.constant 0 : index
    %c0_8 = arith.constant 0 : index
    %4 = vector.load %arg2[%c0_6, %c2, %c0_7, %c0_8] : memref<8x4x8x8xf32, #tpu.memory_space<vmem>>, vector<8x1x8x8xf32>
    %5 = vector.shape_cast %4 : vector<8x1x8x8xf32> to vector<8x8x8xf32>
    %c0_9 = arith.constant 0 : index
    %c3 = arith.constant 3 : index
    %c0_10 = arith.constant 0 : index
    %c0_11 = arith.constant 0 : index
    %6 = vector.load %arg2[%c0_9, %c3, %c0_10, %c0_11] : memref<8x4x8x8xf32, #tpu.memory_space<vmem>>, vector<8x1x8x8xf32>
    %7 = vector.shape_cast %6 : vector<8x1x8x8xf32> to vector<8x8x8xf32>
    %8 = arith.addf %1, %3 : vector<8x8x8xf32>
    %9 = arith.subf %1, %3 : vector<8x8x8xf32>
    %10 = arith.addf %5, %7 : vector<8x8x8xf32>
    %11 = arith.subf %5, %7 : vector<8x8x8xf32>
    %12 = arith.addf %8, %10 : vector<8x8x8xf32>
    %cst = arith.constant 0.49999997 : f32
    %13 = vector.broadcast %cst : f32 to vector<8x8x8xf32>
    %14 = arith.mulf %13, %12 : vector<8x8x8xf32>
    %c0_12 = arith.constant 0 : index
    %c0_13 = arith.constant 0 : index
    %c0_14 = arith.constant 0 : index
    %15 = vector.load %arg3[%c0_12, %c0_13, %c0_14] : memref<8x8x8xf32, #tpu.memory_space<vmem>>, vector<8x8x8xf32>
    tpu.vector_store %arg3[%c0_12, %c0_13, %c0_14], %14 {strides = array<i32>} : memref<8x8x8xf32, #tpu.memory_space<vmem>>, vector<8x8x8xf32>,
    %16 = arith.subf %8, %10 : vector<8x8x8xf32>
    %cst_15 = arith.constant 0.49999997 : f32
    %17 = vector.broadcast %cst_15 : f32 to vector<8x8x8xf32>
    %18 = arith.mulf %17, %16 : vector<8x8x8xf32>
    %c0_16 = arith.constant 0 : index
    %c0_17 = arith.constant 0 : index
    %c0_18 = arith.constant 0 : index
    %c0_19 = arith.constant 0 : index
    %19 = vector.load %arg4[%c0_16, %c0_17, %c0_18, %c0_19] : memref<8x3x8x8xf32, #tpu.memory_space<vmem>>, vector<8x1x8x8xf32>
    %20 = vector.shape_cast %19 : vector<8x1x8x8xf32> to vector<8x8x8xf32>
    %21 = vector.shape_cast %18 : vector<8x8x8xf32> to vector<8x1x8x8xf32>
    tpu.vector_store %arg4[%c0_16, %c0_17, %c0_18, %c0_19], %21 {strides = array<i32>} : memref<8x3x8x8xf32, #tpu.memory_space<vmem>>, vector<8x1x8x8xf32>,
    %22 = arith.addf %9, %11 : vector<8x8x8xf32>
    %cst_20 = arith.constant 0.49999997 : f32
    %23 = vector.broadcast %cst_20 : f32 to vector<8x8x8xf32>
    %24 = arith.mulf %23, %22 : vector<8x8x8xf32>
    %c0_21 = arith.constant 0 : index
    %c1_22 = arith.constant 1 : index
    %c0_23 = arith.constant 0 : index
    %c0_24 = arith.constant 0 : index
    %25 = vector.load %arg4[%c0_21, %c1_22, %c0_23, %c0_24] : memref<8x3x8x8xf32, #tpu.memory_space<vmem>>, vector<8x1x8x8xf32>
    %26 = vector.shape_cast %25 : vector<8x1x8x8xf32> to vector<8x8x8xf32>
    %27 = vector.shape_cast %24 : vector<8x8x8xf32> to vector<8x1x8x8xf32>
    tpu.vector_store %arg4[%c0_21, %c1_22, %c0_23, %c0_24], %27 {strides = array<i32>} : memref<8x3x8x8xf32, #tpu.memory_space<vmem>>, vector<8x1x8x8xf32>,
    %28 = arith.subf %9, %11 : vector<8x8x8xf32>
    %cst_25 = arith.constant 0.49999997 : f32
    %29 = vector.broadcast %cst_25 : f32 to vector<8x8x8xf32>
    %30 = arith.mulf %29, %28 : vector<8x8x8xf32>
    %c0_26 = arith.constant 0 : index
    %c2_27 = arith.constant 2 : index
    %c0_28 = arith.constant 0 : index
    %c0_29 = arith.constant 0 : index
    %31 = vector.load %arg4[%c0_26, %c2_27, %c0_28, %c0_29] : memref<8x3x8x8xf32, #tpu.memory_space<vmem>>, vector<8x1x8x8xf32>
    %32 = vector.shape_cast %31 : vector<8x1x8x8xf32> to vector<8x8x8xf32>
    %33 = vector.shape_cast %30 : vector<8x8x8xf32> to vector<8x1x8x8xf32>
    tpu.vector_store %arg4[%c0_26, %c2_27, %c0_28, %c0_29], %33 {strides = array<i32>} : memref<8x3x8x8xf32, #tpu.memory_space<vmem>>, vector<8x1x8x8xf32>,
    return
  }
  func.func @transform_0(%arg0: i32, %arg1: i32) -> (i32, i32, i32, i32) {
    %c0_i32 = arith.constant 0 : i32
    %c0_i32_0 = arith.constant 0 : i32
    %c0_i32_1 = arith.constant 0 : i32
    return %arg0, %c0_i32, %arg1, %c0_i32_0 : i32, i32, i32, i32
  }
  func.func @transform_1(%arg0: i32, %arg1: i32) -> (i32, i32, i32) {
    %c0_i32 = arith.constant 0 : i32
    %c0_i32_0 = arith.constant 0 : i32
    return %arg0, %arg1, %c0_i32 : i32, i32, i32
  }
  func.func @transform_2(%arg0: i32, %arg1: i32) -> (i32, i32, i32, i32) {
    %c0_i32 = arith.constant 0 : i32
    %c0_i32_0 = arith.constant 0 : i32
    %c0_i32_1 = arith.constant 0 : i32
    return %arg0, %c0_i32, %arg1, %c0_i32_0 : i32, i32, i32, i32
  }
}

</mosaic_0001>

<llo_original>
// kernel: tpu_custom_call.1
$region0: #{tpu_custom_call.1}
  #allocation0 [shape = 'u32[]', space=smem, size = 0x4, offset = 0x4, fixed_abs, tag = 'smem constant byte address 0x4 - core index']
  #allocation1 [shape = 'u32[144,128]{1,0:T(1,128)}', space=vmem, size = 0x12000, scoped, tag = 'internal scratch']
  %s0 = inlined_call_operand.hbm [shape: f32[8,4,8,8], index: 0, kind: input, shape index: {}]
  %s1 = inlined_call_operand.hbm [shape: f32[8,8,8], index: 1, kind: output, shape index: {0}]
  %s2 = inlined_call_operand.hbm [shape: f32[8,3,8,8], index: 2, kind: output, shape index: {1}]
  %3 = xla_tuple %s1, %s2
  %s4 = sld [smem:[#allocation0]]
  $region26: #{tpu_custom_call.1} parent=0
    _
  %s6 = ssub.s32 1, %s4
  %s7 = scalar_select 0, %s6, %s4
  $region1: #{tpu_custom_call.1} parent=0
    #allocation2 [shape = 'u8[131072]{0}', space=vmem, size = 0x20000, scoped, tag = 'input window, operand 0, single buffered']
    #allocation3 [shape = 's32[1]{0}', space=sflag, size = 0x4, scoped, tag = 'scoped memory for tpu_custom_call.1']
    #allocation4 [shape = 's32[1]{0}', space=sflag, size = 0x4, scoped, tag = 'scoped memory for tpu_custom_call.1']
    #allocation5 [shape = 'u8[32768]{0}', space=vmem, size = 0x8000, scoped, tag = 'output window, operand 0, single buffered']
    #allocation6 [shape = 'u8[98304]{0}', space=vmem, size = 0x18000, scoped, tag = 'output window, operand 1, single buffered']
    #allocation7 [shape = 's32[1]{0}', space=sflag, size = 0x4, scoped, tag = 'scoped memory for tpu_custom_call.1']
    %8 = vsyncpa [#allocation3], 0
    %9 = vsyncpa [#allocation4], 0
    %10 = vsyncpa [#allocation7], 0
    // Predicated region
    $region2: #{tpu_custom_call.1} parent=1 // pred_check
      _
    $region3: #{tpu_custom_call.1} parent=1 // pred_check_branch
      %12 = sbr.rel (0) target = $region5
    $region4: #{tpu_custom_call.1} parent=1 // pred_region
      %s14 = ssub.s32 4096, 4096
      %15 = vsyncadd [#allocation3], %s14
      %s16 = sshll.u32 [#allocation2], 4
      %s17 = int_to_ptr.vmem [resolvable:$true] %s16
      %22 = dma.hbm_to_vmem [thread:$0]  %s0, 4096, %s17, [#allocation3], 128, 128, 8
    $region5: #{tpu_custom_call.1} parent=1 // pred_fallthru
      _
    // Predicated region
    $region6: #{tpu_custom_call.1} parent=1 // pred_check
      _
    $region7: #{tpu_custom_call.1} parent=1 // pred_check_branch
      %24 = sbr.rel (0) target = $region9
    $region8: #{tpu_custom_call.1} parent=1 // pred_region
      %25 = dma.done [#allocation3], 4096
    $region9: #{tpu_custom_call.1} parent=1 // pred_fallthru
      _
    %v26 = vld [vmem:[#allocation2] sm:$0xff]
    %v27 = vld [vmem:[#allocation2 + $0x20] sm:$0xff]
    %v28 = vld [vmem:[#allocation2 + $0x40] sm:$0xff]
    %v29 = vld [vmem:[#allocation2 + $0x60] sm:$0xff]
    %v30 = vld [vmem:[#allocation2 + $0x80] sm:$0xff]
    %v31 = vld [vmem:[#allocation2 + $0xa0] sm:$0xff]
    %v32 = vld [vmem:[#allocation2 + $0xc0] sm:$0xff]
    %v33 = vld [vmem:[#allocation2 + $0xe0] sm:$0xff]
    %s34 = scalar_lea.vmem [#allocation2], 8
    %v35 = vld [vmem:[%s34] sm:$0xff]
    %v36 = vld [vmem:[%s34 + $0x20] sm:$0xff]
    %v37 = vld [vmem:[%s34 + $0x40] sm:$0xff]
    %v38 = vld [vmem:[%s34 + $0x60] sm:$0xff]
    %v39 = vld [vmem:[%s34 + $0x80] sm:$0xff]
    %v40 = vld [vmem:[%s34 + $0xa0] sm:$0xff]
    %v41 = vld [vmem:[%s34 + $0xc0] sm:$0xff]
    %v42 = vld [vmem:[%s34 + $0xe0] sm:$0xff]
    %s43 = scalar_lea.vmem [#allocation2], 16
    %v44 = vld [vmem:[%s43] sm:$0xff]
    %v45 = vld [vmem:[%s43 + $0x20] sm:$0xff]
    %v46 = vld [vmem:[%s43 + $0x40] sm:$0xff]
    %v47 = vld [vmem:[%s43 + $0x60] sm:$0xff]
    %v48 = vld [vmem:[%s43 + $0x80] sm:$0xff]
    %v49 = vld [vmem:[%s43 + $0xa0] sm:$0xff]
    %v50 = vld [vmem:[%s43 + $0xc0] sm:$0xff]
    %v51 = vld [vmem:[%s43 + $0xe0] sm:$0xff]
    %s52 = scalar_lea.vmem [#allocation2], 24
    %v53 = vld [vmem:[%s52] sm:$0xff]
    %v54 = vld [vmem:[%s52 + $0x20] sm:$0xff]
    %v55 = vld [vmem:[%s52 + $0x40] sm:$0xff]
    %v56 = vld [vmem:[%s52 + $0x60] sm:$0xff]
    %v57 = vld [vmem:[%s52 + $0x80] sm:$0xff]
    %v58 = vld [vmem:[%s52 + $0xa0] sm:$0xff]
    %v59 = vld [vmem:[%s52 + $0xc0] sm:$0xff]
    %v60 = vld [vmem:[%s52 + $0xe0] sm:$0xff]
    %v61 = vadd.f32 %v26, %v35
    %v62 = vadd.f32 %v27, %v36
    %v63 = vadd.f32 %v28, %v37
    %v64 = vadd.f32 %v29, %v38
    %v65 = vadd.f32 %v30, %v39
    %v66 = vadd.f32 %v31, %v40
    %v67 = vadd.f32 %v32, %v41
    %v68 = vadd.f32 %v33, %v42
    %v69 = vsub.f32 %v26, %v35
    %v70 = vsub.f32 %v27, %v36
    %v71 = vsub.f32 %v28, %v37
    %v72 = vsub.f32 %v29, %v38
    %v73 = vsub.f32 %v30, %v39
    %v74 = vsub.f32 %v31, %v40
    %v75 = vsub.f32 %v32, %v41
    %v76 = vsub.f32 %v33, %v42
    %v77 = vadd.f32 %v44, %v53
    %v78 = vadd.f32 %v45, %v54
    %v79 = vadd.f32 %v46, %v55
    %v80 = vadd.f32 %v47, %v56
    %v81 = vadd.f32 %v48, %v57
    %v82 = vadd.f32 %v49, %v58
    %v83 = vadd.f32 %v50, %v59
    %v84 = vadd.f32 %v51, %v60
    %v85 = vsub.f32 %v44, %v53
    %v86 = vsub.f32 %v45, %v54
    %v87 = vsub.f32 %v46, %v55
    %v88 = vsub.f32 %v47, %v56
    %v89 = vsub.f32 %v48, %v57
    %v90 = vsub.f32 %v49, %v58
    %v91 = vsub.f32 %v50, %v59
    %v92 = vsub.f32 %v51, %v60
    %v93 = vadd.f32 %v61, %v77
    %v94 = vadd.f32 %v62, %v78
    %v95 = vadd.f32 %v63, %v79
    %v96 = vadd.f32 %v64, %v80
    %v97 = vadd.f32 %v65, %v81
    %v98 = vadd.f32 %v66, %v82
    %v99 = vadd.f32 %v67, %v83
    %v100 = vadd.f32 %v68, %v84
    %v101 = vmul.f32 %v93, 0.49999997
    %v102 = vmul.f32 %v94, 0.49999997
    %v103 = vmul.f32 %v95, 0.49999997
    %v104 = vmul.f32 %v96, 0.49999997
    %v105 = vmul.f32 %v97, 0.49999997
    %v106 = vmul.f32 %v98, 0.49999997
    %v107 = vmul.f32 %v99, 0.49999997
    %v108 = vmul.f32 %v100, 0.49999997
    %vm109 = vcmask 64512
    %110 = vst.msk [vmem:[#allocation5] sm:$0xff] %vm109, %v101
    %111 = vst.msk [vmem:[#allocation5 + $0x8] sm:$0xff] %vm109, %v102
    %112 = vst.msk [vmem:[#allocation5 + $0x10] sm:$0xff] %vm109, %v103
    %113 = vst.msk [vmem:[#allocation5 + $0x18] sm:$0xff] %vm109, %v104
    %114 = vst.msk [vmem:[#allocation5 + $0x20] sm:$0xff] %vm109, %v105
    %115 = vst.msk [vmem:[#allocation5 + $0x28] sm:$0xff] %vm109, %v106
    %116 = vst.msk [vmem:[#allocation5 + $0x30] sm:$0xff] %vm109, %v107
    %117 = vst.msk [vmem:[#allocation5 + $0x38] sm:$0xff] %vm109, %v108
    %v118 = vsub.f32 %v61, %v77
    %v119 = vsub.f32 %v62, %v78
    %v120 = vsub.f32 %v63, %v79
    %v121 = vsub.f32 %v64, %v80
    %v122 = vsub.f32 %v65, %v81
    %v123 = vsub.f32 %v66, %v82
    %v124 = vsub.f32 %v67, %v83
    %v125 = vsub.f32 %v68, %v84
    %v126 = vmul.f32 %v118, 0.49999997
    %v127 = vmul.f32 %v119, 0.49999997
    %v128 = vmul.f32 %v120, 0.49999997
    %v129 = vmul.f32 %v121, 0.49999997
    %v130 = vmul.f32 %v122, 0.49999997
    %v131 = vmul.f32 %v123, 0.49999997
    %v132 = vmul.f32 %v124, 0.49999997
    %v133 = vmul.f32 %v125, 0.49999997
    %134 = vst.msk [vmem:[#allocation6] sm:$0xff] %vm109, %v126
    %135 = vst.msk [vmem:[#allocation6 + $0x18] sm:$0xff] %vm109, %v127
    %136 = vst.msk [vmem:[#allocation6 + $0x30] sm:$0xff] %vm109, %v128
    %137 = vst.msk [vmem:[#allocation6 + $0x48] sm:$0xff] %vm109, %v129
    %138 = vst.msk [vmem:[#allocation6 + $0x60] sm:$0xff] %vm109, %v130
    %139 = vst.msk [vmem:[#allocation6 + $0x78] sm:$0xff] %vm109, %v131
    %140 = vst.msk [vmem:[#allocation6 + $0x90] sm:$0xff] %vm109, %v132
    %141 = vst.msk [vmem:[#allocation6 + $0xa8] sm:$0xff] %vm109, %v133
    %v142 = vadd.f32 %v69, %v85
    %v143 = vadd.f32 %v70, %v86
    %v144 = vadd.f32 %v71, %v87
    %v145 = vadd.f32 %v72, %v88
    %v146 = vadd.f32 %v73, %v89
    %v147 = vadd.f32 %v74, %v90
    %v148 = vadd.f32 %v75, %v91
    %v149 = vadd.f32 %v76, %v92
    %v150 = vmul.f32 %v142, 0.49999997
    %v151 = vmul.f32 %v143, 0.49999997
    %v152 = vmul.f32 %v144, 0.49999997
    %v153 = vmul.f32 %v145, 0.49999997
    %v154 = vmul.f32 %v146, 0.49999997
    %v155 = vmul.f32 %v147, 0.49999997
    %v156 = vmul.f32 %v148, 0.49999997
    %v157 = vmul.f32 %v149, 0.49999997
    %s158 = scalar_lea.vmem [#allocation6], 8
    %159 = vst.msk [vmem:[%s158] sm:$0xff] %vm109, %v150
    %160 = vst.msk [vmem:[%s158 + $0x18] sm:$0xff] %vm109, %v151
    %161 = vst.msk [vmem:[%s158 + $0x30] sm:$0xff] %vm109, %v152
    %162 = vst.msk [vmem:[%s158 + $0x48] sm:$0xff] %vm109, %v153
    %163 = vst.msk [vmem:[%s158 + $0x60] sm:$0xff] %vm109, %v154
    %164 = vst.msk [vmem:[%s158 + $0x78] sm:$0xff] %vm109, %v155
    %165 = vst.msk [vmem:[%s158 + $0x90] sm:$0xff] %vm109, %v156
    %166 = vst.msk [vmem:[%s158 + $0xa8] sm:$0xff] %vm109, %v157
    %v167 = vsub.f32 %v69, %v85
    %v168 = vsub.f32 %v70, %v86
    %v169 = vsub.f32 %v71, %v87
    %v170 = vsub.f32 %v72, %v88
    %v171 = vsub.f32 %v73, %v89
    %v172 = vsub.f32 %v74, %v90
    %v173 = vsub.f32 %v75, %v91
    %v174 = vsub.f32 %v76, %v92
    %v175 = vmul.f32 %v167, 0.49999997
    %v176 = vmul.f32 %v168, 0.49999997
    %v177 = vmul.f32 %v169, 0.49999997
    %v178 = vmul.f32 %v170, 0.49999997
    %v179 = vmul.f32 %v171, 0.49999997
    %v180 = vmul.f32 %v172, 0.49999997
    %v181 = vmul.f32 %v173, 0.49999997
    %v182 = vmul.f32 %v174, 0.49999997
    %s183 = scalar_lea.vmem [#allocation6], 16
    %184 = vst.msk [vmem:[%s183] sm:$0xff] %vm109, %v175
    %185 = vst.msk [vmem:[%s183 + $0x18] sm:$0xff] %vm109, %v176
    %186 = vst.msk [vmem:[%s183 + $0x30] sm:$0xff] %vm109, %v177
    %187 = vst.msk [vmem:[%s183 + $0x48] sm:$0xff] %vm109, %v178
    %188 = vst.msk [vmem:[%s183 + $0x60] sm:$0xff] %vm109, %v179
    %189 = vst.msk [vmem:[%s183 + $0x78] sm:$0xff] %vm109, %v180
    %190 = vst.msk [vmem:[%s183 + $0x90] sm:$0xff] %vm109, %v181
    %191 = vst.msk [vmem:[%s183 + $0xa8] sm:$0xff] %vm109, %v182
    // Predicated region
    $region10: #{tpu_custom_call.1} parent=1 // pred_check
      _
    $region11: #{tpu_custom_call.1} parent=1 // pred_check_branch
      %193 = sbr.rel (0) target = $region13
    $region12: #{tpu_custom_call.1} parent=1 // pred_region
      %s195 = ssub.s32 1024, 1024
      %196 = vsyncadd [#allocation4], %s195
      %s197 = sshll.u32 [#allocation5], 4
      %s198 = int_to_ptr.vmem [resolvable:$true] %s197
      %203 = dma.vmem_to_hbm [thread:$0]  %s198, 1024, %s1, [#allocation4], 128, 128, 8
    $region13: #{tpu_custom_call.1} parent=1 // pred_fallthru
      _
    // Predicated region
    $region14: #{tpu_custom_call.1} parent=1 // pred_check
      _
    $region15: #{tpu_custom_call.1} parent=1 // pred_check_branch
      %205 = sbr.rel (0) target = $region17
    $region16: #{tpu_custom_call.1} parent=1 // pred_region
      %s207 = ssub.s32 3072, 3072
      %208 = vsyncadd [#allocation7], %s207
      %s209 = sshll.u32 [#allocation6], 4
      %s210 = int_to_ptr.vmem [resolvable:$true] %s209
      %215 = dma.vmem_to_hbm [thread:$0]  %s210, 3072, %s2, [#allocation7], 128, 128, 8
    $region17: #{tpu_custom_call.1} parent=1 // pred_fallthru
      _
    // Predicated region
    $region18: #{tpu_custom_call.1} parent=1 // pred_check
      _
    $region19: #{tpu_custom_call.1} parent=1 // pred_check_branch
      %217 = sbr.rel (0) target = $region21
    $region20: #{tpu_custom_call.1} parent=1 // pred_region
      %218 = dma.done [#allocation4], 1024
    $region21: #{tpu_custom_call.1} parent=1 // pred_fallthru
      _
    // Predicated region
    $region22: #{tpu_custom_call.1} parent=1 // pred_check
      _
    $region23: #{tpu_custom_call.1} parent=1 // pred_check_branch
      %220 = sbr.rel (0) target = $region25
    $region24: #{tpu_custom_call.1} parent=1 // pred_region
      %221 = dma.done [#allocation7], 3072
    $region25: #{tpu_custom_call.1} parent=1 // pred_fallthru
      _
    %222 = vsyncpa [#allocation3], 1
    %223 = vsyncpa [#allocation4], 1
    %224 = vsyncpa [#allocation7], 1

</llo_original>
